<compile_context>
chip_gen: v6e
topology: v6e:2x2x1
jax: 0.10.0
libtpu: 0.0.40
codegen_flags: <defaults>
</compile_context>

<pallas_src>
import functools

import numpy as np
import jax
import jax.numpy as jnp
from jax.experimental import pallas as pl
from jax.experimental.pallas import tpu as pltpu


def _round_up(x, m):
    return ((x + m - 1) // m) * m


def _ecc_kernel(tn, te,
                cb_ref, nc_ref,                        # scalar prefetch (SMEM)
                xsel_ref, ef_ref, seg_ref, invd_ref,   # per-edge-chunk tiles
                w1_ref, b1_ref, w2_ref, b2_ref,        # filter-net params (resident)
                r_ref, s_ref,                          # constant 0/1 helpers (resident)
                out_ref):
    t = pl.program_id(0)           # node tile   ("parallel")
    c = pl.program_id(1)           # edge chunk  ("arbitrary" reduction axis)

    @pl.when(c == 0)
    def _init():
        out_ref[...] = jnp.zeros_like(out_ref)

    # Ragged schedule: skip chunks past this node tile's edge range.
    @pl.when(c < nc_ref[t])
    def _accumulate():
        # 1) filter net: Linear(F,H) -> ReLU -> Linear(H, C_in*C_out_pad)   (MXU)
        # TODO(synk): on v6e/v7x cast ef/w1/h/w2 to bf16 (keep f32 accumulation);
        # kept f32 here so the demo matches the f32 reference tightly.
        h = jnp.dot(ef_ref[...], w1_ref[...], preferred_element_type=jnp.float32)
        h = jnp.maximum(h + b1_ref[...], 0.0)
        wflat = jnp.dot(h, w2_ref[...], preferred_element_type=jnp.float32) + b2_ref[...]

        # 2) per-edge bmm: products[e,o] = sum_i xsel[e,i] * W_e[i,o]
        #    R replicates each x column across its lane-aligned C_out_pad block (MXU),
        #    one fused VPU multiply, S folds the C_in groups back (MXU).
        xrep = jnp.dot(xsel_ref[...], r_ref[...], preferred_element_type=jnp.float32)
        prod = jnp.dot(xrep * wflat, s_ref[...], preferred_element_type=jnp.float32)

        # 3) segment mean: deg-scaled one-hot built in-kernel from int32 seg ids.
        #    Padded edges carry seg=-1 and edges of other node tiles fall outside
        #    [t*tn, (t+1)*tn), so they contribute 0. deg==0 rows never get touched.
        node_ids = jax.lax.broadcasted_iota(jnp.int32, (tn, te), 0) + t * tn
        w = jnp.where(seg_ref[...] == node_ids, invd_ref[...], 0.0)
        out_ref[...] += jnp.dot(w, prod, preferred_element_type=jnp.float32)


def graph_conv_forward(x, idxn, idxe, degs, edgefeats, params, in_c, out_c,
                       *, edge_tile=1024, node_tile=256):
    """Pallas forward of GraphConvModulePureAutograd."""
    w1, b1, w2, b2 = params
    degs = np.asarray(degs, dtype=np.int64)
    N = int(degs.shape[0])

    # ---- glue gathers (plain XLA ops) ------------------------------------
    if idxe is not None:
        edgefeats = jnp.asarray(edgefeats)[jnp.asarray(idxe)]
    # TODO(synk): pull the x[idxn] gather into the kernel (scalar-prefetched idxn +
    # manual DMA gather) to avoid this extra HBM pass; kept as XLA glue here.
    xsel = jnp.asarray(x, jnp.float32)[jnp.asarray(idxn)]          # (E, C_in)
    edgefeats = jnp.asarray(edgefeats, jnp.float32)
    E = int(xsel.shape[0])
    F = int(edgefeats.shape[1])
    H = int(np.asarray(w1).shape[1])

    # ---- tiling -----------------------------------------------------------
    assert edge_tile % 128 == 0 and node_tile % 8 == 0
    COP = _round_up(out_c, 128)                        # lane-padded C_out
    et = edge_tile                                     # keep (TE, C_in*COP) temps small
    while et > 128 and et * in_c * COP * 4 > (4 << 20):
        et //= 2
    e8 = _round_up(max(E, 1), 8)
    TE = e8 if e8 <= et else et                        # single edge tile for tiny graphs
    E_pad = _round_up(max(E, 1), TE)
    n8 = _round_up(max(N, 1), 8)
    TN = n8 if n8 <= node_tile else node_tile
    N_pad = _round_up(max(N, 1), TN)

    # ---- pad per-edge arrays ----------------------------------------------
    xsel_p = jnp.pad(xsel, ((0, E_pad - E), (0, 0)))
    ef_p = jnp.pad(edgefeats, ((0, E_pad - E), (0, 0)))

    seg_np = np.full((E_pad,), -1, dtype=np.int32)
    if E > 0:
        seg_np[:E] = np.repeat(np.arange(N, dtype=np.int32), degs)
    deg_safe = np.where(degs > 0, degs, 1).astype(np.float32)
    invd_np = np.zeros((E_pad,), dtype=np.float32)
    if E > 0:
        invd_np[:E] = 1.0 / deg_safe[seg_np[:E]]
    seg_id = jnp.asarray(seg_np).reshape(1, E_pad)
    invd = jnp.asarray(invd_np).reshape(1, E_pad)

    # ---- lane-pad filter-net output channels to COP (trim in wrapper) -------
    w2_np = np.asarray(w2, np.float32).reshape(H, in_c * out_c)
    b2_np = np.asarray(b2, np.float32).reshape(1, in_c * out_c)
    w2_p = np.zeros((H, in_c * COP), np.float32)
    b2_p = np.zeros((1, in_c * COP), np.float32)
    for i in range(in_c):
        w2_p[:, i * COP:i * COP + out_c] = w2_np[:, i * out_c:(i + 1) * out_c]
        b2_p[:, i * COP:i * COP + out_c] = b2_np[:, i * out_c:(i + 1) * out_c]
    w1_a = jnp.asarray(w1, jnp.float32).reshape(F, H)
    b1_a = jnp.asarray(b1, jnp.float32).reshape(1, H)
    w2_a = jnp.asarray(w2_p)
    b2_a = jnp.asarray(b2_p)

    # ---- constant 0/1 matrices for the lane-aligned bmm ----------------------
    R_np = np.zeros((in_c, in_c * COP), np.float32)
    S_np = np.zeros((in_c * COP, COP), np.float32)
    eye = np.eye(COP, dtype=np.float32)
    for i in range(in_c):
        R_np[i, i * COP:(i + 1) * COP] = 1.0
        S_np[i * COP:(i + 1) * COP, :] = eye
    R = jnp.asarray(R_np)
    S = jnp.asarray(S_np)

    # ---- ragged schedule: contiguous edge-chunk range per node tile ----------
    node_off = np.concatenate([[0], np.cumsum(degs)]).astype(np.int64)
    T = N_pad // TN
    n_eblocks = E_pad // TE
    last_block = n_eblocks - 1
    chunk_base = np.zeros((T,), np.int32)
    nchunks = np.zeros((T,), np.int32)
    for t in range(T):
        lo = int(node_off[min(t * TN, N)])
        hi = int(node_off[min((t + 1) * TN, N)])
        if hi > lo:
            cb = lo // TE
            chunk_base[t] = cb
            nchunks[t] = (hi - 1) // TE - cb + 1
    max_chunks = max(1, int(nchunks.max()))
    chunk_base_a = jnp.asarray(chunk_base)
    nchunks_a = jnp.asarray(nchunks)

    # ---- BlockSpecs (index maps get the scalar-prefetch refs positionally) ----
    def edge_rows(t, c, cb, nc):
        return (jnp.minimum(cb[t] + c, last_block), 0)

    def edge_lanes(t, c, cb, nc):
        return (0, jnp.minimum(cb[t] + c, last_block))

    def resident(t, c, cb, nc):
        return (0, 0)

    def out_map(t, c, cb, nc):
        return (t, 0)

    kernel = functools.partial(_ecc_kernel, TN, TE)

    flops = 2 * E_pad * (F * H + H * in_c * COP + in_c * COP) + 2 * E_pad * TN * COP
    bytes_accessed = 4 * (E_pad * (F + in_c + 2) + N_pad * COP
                          + F * H + H + H * in_c * COP + in_c * COP
                          + in_c * in_c * COP + in_c * COP * COP)

    out_padded = pl.pallas_call(
        kernel,
        grid_spec=pltpu.PrefetchScalarGridSpec(
            num_scalar_prefetch=2,
            grid=(T, max_chunks),
            in_specs=[
                pl.BlockSpec((TE, in_c), edge_rows),          # gathered node feats
                pl.BlockSpec((TE, F), edge_rows),             # edge features
                pl.BlockSpec((1, TE), edge_lanes),            # segment (dest node) ids
                pl.BlockSpec((1, TE), edge_lanes),            # 1/deg per edge
                pl.BlockSpec((F, H), resident),               # w1
                pl.BlockSpec((1, H), resident),               # b1
                pl.BlockSpec((H, in_c * COP), resident),      # w2 (lane padded)
                pl.BlockSpec((1, in_c * COP), resident),      # b2 (lane padded)
                pl.BlockSpec((in_c, in_c * COP), resident),   # R (replicate)
                pl.BlockSpec((in_c * COP, COP), resident),    # S (fold C_in)
            ],
            out_specs=pl.BlockSpec((TN, COP), out_map),
        ),
        out_shape=jax.ShapeDtypeStruct((N_pad, COP), jnp.float32),
        compiler_params=pltpu.CompilerParams(
            dimension_semantics=("parallel", "arbitrary"),
            vmem_limit_bytes=32 * 1024 * 1024),
        cost_estimate=pl.CostEstimate(flops=int(flops), transcendentals=0,
                                      bytes_accessed=int(bytes_accessed)),
    )(chunk_base_a, nchunks_a,
      xsel_p, ef_p, seg_id, invd,
      w1_a, b1_a, w2_a, b2_a, R, S)

    return out_padded[:N, :out_c]


def _reference_forward(x, idxn, degs, edgefeats, params, in_c, out_c):
    """Pure-JAX / numpy reference mirroring the PyTorch module semantics."""
    w1, b1, w2, b2 = params
    h = jnp.maximum(edgefeats @ w1 + b1, 0.0)
    wflat = h @ w2 + b2
    W = wflat.reshape(-1, in_c, out_c)
    xsel = x[jnp.asarray(idxn)]
    prod = jnp.einsum("ei,eio->eo", xsel, W)
    outs, k = [], 0
    for d in np.asarray(degs):
        d = int(d)
        if d > 0:
            outs.append(prod[k:k + d].mean(axis=0))
        else:
            outs.append(jnp.zeros((out_c,), jnp.float32))
        k += d
    return jnp.stack(outs)


if __name__ == "__main__":
    # Small synthetic graph.
    N, E = 8, 16                 # nodes, edges
    IC, OC = 4, 8                # in_channels, out_channels
    F, H = 6, 16                 # edge-feature dim, filter-net hidden dim

    key = jax.random.PRNGKey(0)
    k0, k1, k2, k3, k4 = jax.random.split(key, 5)

    x = jax.random.normal(k0, (N, IC), jnp.float32)              # node features
    edgefeats = jax.random.normal(k1, (E, F), jnp.float32)       # per-edge features

    # Filter net parameters: Linear(F,H) -> ReLU -> Linear(H, IC*OC).
    w1 = jax.random.normal(k2, (F, H), jnp.float32) * 0.2
    b1 = jnp.zeros((1, H), jnp.float32)
    w2 = jax.random.normal(k3, (H, IC * OC), jnp.float32) * 0.2
    b2 = jax.random.normal(k4, (1, IC * OC), jnp.float32) * 0.01
    params = (w1, b1, w2, b2)

    # Graph connectivity: contiguous edge groups per destination node.
    degs = np.array([2, 3, 0, 1, 2, 4, 2, 2], dtype=np.int32)    # sum == E
    idxn = np.arange(E, dtype=np.int32) % N                      # source node per edge
    idxe = None                                                   # no weight sharing

    out = graph_conv_forward(x, idxn, idxe, degs, edgefeats, params, IC, OC)
    out = jax.block_until_ready(out)

    ref = _reference_forward(x, idxn, degs, edgefeats, params, IC, OC)
    np.testing.assert_allclose(np.asarray(out), np.asarray(ref), rtol=1e-4, atol=1e-5)

    print("KERNEL_OK")
</pallas_src>

<mosaic_0001>
module attributes {stable_mosaic.version = 11 : i64} {
  func.func @_ecc_kernel(%arg0: i32, %arg1: i32, %arg2: memref<1xi32, #tpu.memory_space<smem>>, %arg3: memref<1xi32, #tpu.memory_space<smem>>, %arg4: memref<16x4xf32, #tpu.memory_space<vmem>>, %arg5: memref<16x6xf32, #tpu.memory_space<vmem>>, %arg6: memref<1x16xi32, #tpu.memory_space<vmem>>, %arg7: memref<1x16xf32, #tpu.memory_space<vmem>>, %arg8: memref<6x16xf32, #tpu.memory_space<vmem>>, %arg9: memref<1x16xf32, #tpu.memory_space<vmem>>, %arg10: memref<16x512xf32, #tpu.memory_space<vmem>>, %arg11: memref<1x512xf32, #tpu.memory_space<vmem>>, %arg12: memref<4x512xf32, #tpu.memory_space<vmem>>, %arg13: memref<512x128xf32, #tpu.memory_space<vmem>>, %arg14: memref<8x128xf32, #tpu.memory_space<vmem>>) attributes {dimension_semantics = [#tpu.dimension_semantics<parallel>, #tpu.dimension_semantics<arbitrary>], iteration_bounds = array<i64: 1, 1>, scalar_prefetch = 2 : i64, scratch_operands = 0 : i64, tpu.core_type = #tpu.core_type<tc>, window_params = [{transform_indices = @transform_0, window_bounds = array<i64: 16, 4>}, {transform_indices = @transform_1, window_bounds = array<i64: 16, 6>}, {transform_indices = @transform_2, window_bounds = array<i64: 1, 16>}, {transform_indices = @transform_3, window_bounds = array<i64: 1, 16>}, {pipeline_mode = #tpu.pipeline_mode<synchronous>, transform_indices = @transform_4, window_bounds = array<i64: 6, 16>}, {pipeline_mode = #tpu.pipeline_mode<synchronous>, transform_indices = @transform_5, window_bounds = array<i64: 1, 16>}, {pipeline_mode = #tpu.pipeline_mode<synchronous>, transform_indices = @transform_6, window_bounds = array<i64: 16, 512>}, {pipeline_mode = #tpu.pipeline_mode<synchronous>, transform_indices = @transform_7, window_bounds = array<i64: 1, 512>}, {pipeline_mode = #tpu.pipeline_mode<synchronous>, transform_indices = @transform_8, window_bounds = array<i64: 4, 512>}, {pipeline_mode = #tpu.pipeline_mode<synchronous>, transform_indices = @transform_9, window_bounds = array<i64: 512, 128>}, {transform_indices = @transform_10, window_bounds = array<i64: 8, 128>}]} {
    %c0_i32 = arith.constant 0 : i32
    %0 = arith.cmpi eq, %arg1, %c0_i32 : i32
    %1 = arith.extui %0 : i1 to i32
    %c0_i32_0 = arith.constant 0 : i32
    %2 = arith.cmpi ne, %1, %c0_i32_0 : i32
    scf.if %2 {
      %cst = arith.constant 0.000000e+00 : f32
      %8 = vector.broadcast %cst : f32 to vector<8x128xf32>
      %c0 = arith.constant 0 : index
      %c0_2 = arith.constant 0 : index
      %9 = vector.load %arg14[%c0, %c0_2] : memref<8x128xf32, #tpu.memory_space<vmem>>, vector<8x128xf32>
      tpu.vector_store %arg14[%c0, %c0_2], %8 {strides = array<i32>} : memref<8x128xf32, #tpu.memory_space<vmem>>, vector<8x128xf32>,
    } else {
    }
    %3 = arith.index_cast %arg0 : i32 to index
    %4 = memref.load %arg3[%3] : memref<1xi32, #tpu.memory_space<smem>>
    %5 = arith.cmpi slt, %arg1, %4 : i32
    %6 = arith.extui %5 : i1 to i32
    %c0_i32_1 = arith.constant 0 : i32
    %7 = arith.cmpi ne, %6, %c0_i32_1 : i32
    scf.if %7 {
      %c0 = arith.constant 0 : index
      %c0_2 = arith.constant 0 : index
      %8 = vector.load %arg5[%c0, %c0_2] : memref<16x6xf32, #tpu.memory_space<vmem>>, vector<16x6xf32>
      %c0_3 = arith.constant 0 : index
      %c0_4 = arith.constant 0 : index
      %9 = vector.load %arg8[%c0_3, %c0_4] : memref<6x16xf32, #tpu.memory_space<vmem>>, vector<6x16xf32>
      %cst = arith.constant dense<0.000000e+00> : vector<16x16xf32>
      %10 = tpu.matmul %8, %9, %cst {dimension_numbers = #tpu.dot_dimension_numbers<[1], [0], [0], [1], [0, 0, 1, 1], [], []>} : vector<16x6xf32>, vector<6x16xf32>, vector<16x16xf32> -> vector<16x16xf32>
      %c0_5 = arith.constant 0 : index
      %c0_6 = arith.constant 0 : index
      %11 = vector.load %arg9[%c0_5, %c0_6] : memref<1x16xf32, #tpu.memory_space<vmem>>, vector<1x16xf32>
      %12 = vector.broadcast %11 : vector<1x16xf32> to vector<16x16xf32>
      %13 = arith.addf %10, %12 : vector<16x16xf32>
      %cst_7 = arith.constant 0.000000e+00 : f32
      %14 = vector.broadcast %cst_7 : f32 to vector<16x16xf32>
      %15 = arith.maximumf %13, %14 : vector<16x16xf32>
      %c0_8 = arith.constant 0 : index
      %c0_9 = arith.constant 0 : index
      %16 = vector.load %arg10[%c0_8, %c0_9] : memref<16x512xf32, #tpu.memory_space<vmem>>, vector<16x512xf32>
      %cst_10 = arith.constant dense<0.000000e+00> : vector<16x512xf32>
      %17 = tpu.matmul %15, %16, %cst_10 {dimension_numbers = #tpu.dot_dimension_numbers<[1], [0], [0], [1], [0, 0, 1, 1], [], []>} : vector<16x16xf32>, vector<16x512xf32>, vector<16x512xf32> -> vector<16x512xf32>
      %c0_11 = arith.constant 0 : index
      %c0_12 = arith.constant 0 : index
      %18 = vector.load %arg11[%c0_11, %c0_12] : memref<1x512xf32, #tpu.memory_space<vmem>>, vector<1x512xf32>
      %19 = vector.broadcast %18 : vector<1x512xf32> to vector<16x512xf32>
      %20 = arith.addf %17, %19 : vector<16x512xf32>
      %c0_13 = arith.constant 0 : index
      %c0_14 = arith.constant 0 : index
      %21 = vector.load %arg4[%c0_13, %c0_14] : memref<16x4xf32, #tpu.memory_space<vmem>>, vector<16x4xf32>
      %c0_15 = arith.constant 0 : index
      %c0_16 = arith.constant 0 : index
      %22 = vector.load %arg12[%c0_15, %c0_16] : memref<4x512xf32, #tpu.memory_space<vmem>>, vector<4x512xf32>
      %cst_17 = arith.constant dense<0.000000e+00> : vector<16x512xf32>
      %23 = tpu.matmul %21, %22, %cst_17 {dimension_numbers = #tpu.dot_dimension_numbers<[1], [0], [0], [1], [0, 0, 1, 1], [], []>} : vector<16x4xf32>, vector<4x512xf32>, vector<16x512xf32> -> vector<16x512xf32>
      %24 = arith.mulf %23, %20 : vector<16x512xf32>
      %c0_18 = arith.constant 0 : index
      %c0_19 = arith.constant 0 : index
      %25 = vector.load %arg13[%c0_18, %c0_19] : memref<512x128xf32, #tpu.memory_space<vmem>>, vector<512x128xf32>
      %cst_20 = arith.constant dense<0.000000e+00> : vector<16x128xf32>
      %26 = tpu.matmul %24, %25, %cst_20 {dimension_numbers = #tpu.dot_dimension_numbers<[1], [0], [0], [1], [0, 0, 1, 1], [], []>} : vector<16x512xf32>, vector<512x128xf32>, vector<16x128xf32> -> vector<16x128xf32>
      %27 = tpu.iota {dimensions = array<i32: 0>} : vector<8x16xi32>
      %c8_i32 = arith.constant 8 : i32
      %28 = arith.muli %arg0, %c8_i32 : i32
      %29 = vector.broadcast %28 : i32 to vector<8x16xi32>
      %30 = arith.addi %27, %29 : vector<8x16xi32>
      %c0_21 = arith.constant 0 : index
      %c0_22 = arith.constant 0 : index
      %31 = vector.load %arg6[%c0_21, %c0_22] : memref<1x16xi32, #tpu.memory_space<vmem>>, vector<1x16xi32>
      %32 = vector.broadcast %31 : vector<1x16xi32> to vector<8x16xi32>
      %33 = arith.cmpi eq, %32, %30 : vector<8x16xi32>
      %c0_23 = arith.constant 0 : index
      %c0_24 = arith.constant 0 : index
      %34 = vector.load %arg7[%c0_23, %c0_24] : memref<1x16xf32, #tpu.memory_space<vmem>>, vector<1x16xf32>
      %cst_25 = arith.constant 0.000000e+00 : f32
      %35 = vector.shape_cast %34 : vector<1x16xf32> to vector<1x16xf32>
      %36 = vector.broadcast %35 : vector<1x16xf32> to vector<8x16xf32>
      %37 = vector.broadcast %cst_25 : f32 to vector<8x16xf32>
      %38 = arith.select %33, %36, %37 : vector<8x16xi1>, vector<8x16xf32>
      %c0_26 = arith.constant 0 : index
      %c0_27 = arith.constant 0 : index
      %39 = vector.load %arg14[%c0_26, %c0_27] : memref<8x128xf32, #tpu.memory_space<vmem>>, vector<8x128xf32>
      %cst_28 = arith.constant dense<0.000000e+00> : vector<8x128xf32>
      %40 = tpu.matmul %38, %26, %cst_28 {dimension_numbers = #tpu.dot_dimension_numbers<[1], [0], [0], [1], [0, 0, 1, 1], [], []>} : vector<8x16xf32>, vector<16x128xf32>, vector<8x128xf32> -> vector<8x128xf32>
      %41 = arith.addf %39, %40 : vector<8x128xf32>
      %c0_29 = arith.constant 0 : index
      %c0_30 = arith.constant 0 : index
      %42 = vector.load %arg14[%c0_29, %c0_30] : memref<8x128xf32, #tpu.memory_space<vmem>>, vector<8x128xf32>
      tpu.vector_store %arg14[%c0_29, %c0_30], %41 {strides = array<i32>} : memref<8x128xf32, #tpu.memory_space<vmem>>, vector<8x128xf32>,
    } else {
    }
    return
  }
  func.func @transform_0(%arg0: i32, %arg1: i32, %arg2: memref<1xi32, #tpu.memory_space<smem>>, %arg3: memref<1xi32, #tpu.memory_space<smem>>) -> (i32, i32) {
    %0 = arith.index_cast %arg0 : i32 to index
    %1 = memref.load %arg2[%0] : memref<1xi32, #tpu.memory_space<smem>>
    %2 = arith.addi %1, %arg1 : i32
    %c0_i32 = arith.constant 0 : i32
    %3 = arith.minsi %2, %c0_i32 : i32
    %c0_i32_0 = arith.constant 0 : i32
    %c0_i32_1 = arith.constant 0 : i32
    return %3, %c0_i32_0 : i32, i32
  }
  func.func @transform_1(%arg0: i32, %arg1: i32, %arg2: memref<1xi32, #tpu.memory_space<smem>>, %arg3: memref<1xi32, #tpu.memory_space<smem>>) -> (i32, i32) {
    %0 = arith.index_cast %arg0 : i32 to index
    %1 = memref.load %arg2[%0] : memref<1xi32, #tpu.memory_space<smem>>
    %2 = arith.addi %1, %arg1 : i32
    %c0_i32 = arith.constant 0 : i32
    %3 = arith.minsi %2, %c0_i32 : i32
    %c0_i32_0 = arith.constant 0 : i32
    %c0_i32_1 = arith.constant 0 : i32
    return %3, %c0_i32_0 : i32, i32
  }
  func.func @transform_2(%arg0: i32, %arg1: i32, %arg2: memref<1xi32, #tpu.memory_space<smem>>, %arg3: memref<1xi32, #tpu.memory_space<smem>>) -> (i32, i32) {
    %0 = arith.index_cast %arg0 : i32 to index
    %1 = memref.load %arg2[%0] : memref<1xi32, #tpu.memory_space<smem>>
    %2 = arith.addi %1, %arg1 : i32
    %c0_i32 = arith.constant 0 : i32
    %3 = arith.minsi %2, %c0_i32 : i32
    %c0_i32_0 = arith.constant 0 : i32
    %c0_i32_1 = arith.constant 0 : i32
    return %c0_i32_0, %3 : i32, i32
  }
  func.func @transform_3(%arg0: i32, %arg1: i32, %arg2: memref<1xi32, #tpu.memory_space<smem>>, %arg3: memref<1xi32, #tpu.memory_space<smem>>) -> (i32, i32) {
    %0 = arith.index_cast %arg0 : i32 to index
    %1 = memref.load %arg2[%0] : memref<1xi32, #tpu.memory_space<smem>>
    %2 = arith.addi %1, %arg1 : i32
    %c0_i32 = arith.constant 0 : i32
    %3 = arith.minsi %2, %c0_i32 : i32
    %c0_i32_0 = arith.constant 0 : i32
    %c0_i32_1 = arith.constant 0 : i32
    return %c0_i32_0, %3 : i32, i32
  }
  func.func @transform_4(%arg0: i32, %arg1: i32, %arg2: memref<1xi32, #tpu.memory_space<smem>>, %arg3: memref<1xi32, #tpu.memory_space<smem>>) -> (i32, i32) {
    %c0_i32 = arith.constant 0 : i32
    %c0_i32_0 = arith.constant 0 : i32
    %c0_i32_1 = arith.constant 0 : i32
    return %c0_i32, %c0_i32_0 : i32, i32
  }
  func.func @transform_5(%arg0: i32, %arg1: i32, %arg2: memref<1xi32, #tpu.memory_space<smem>>, %arg3: memref<1xi32, #tpu.memory_space<smem>>) -> (i32, i32) {
    %c0_i32 = arith.constant 0 : i32
    %c0_i32_0 = arith.constant 0 : i32
    %c0_i32_1 = arith.constant 0 : i32
    return %c0_i32, %c0_i32_0 : i32, i32
  }
  func.func @transform_6(%arg0: i32, %arg1: i32, %arg2: memref<1xi32, #tpu.memory_space<smem>>, %arg3: memref<1xi32, #tpu.memory_space<smem>>) -> (i32, i32) {
    %c0_i32 = arith.constant 0 : i32
    %c0_i32_0 = arith.constant 0 : i32
    %c0_i32_1 = arith.constant 0 : i32
    return %c0_i32, %c0_i32_0 : i32, i32
  }
  func.func @transform_7(%arg0: i32, %arg1: i32, %arg2: memref<1xi32, #tpu.memory_space<smem>>, %arg3: memref<1xi32, #tpu.memory_space<smem>>) -> (i32, i32) {
    %c0_i32 = arith.constant 0 : i32
    %c0_i32_0 = arith.constant 0 : i32
    %c0_i32_1 = arith.constant 0 : i32
    return %c0_i32, %c0_i32_0 : i32, i32
  }
  func.func @transform_8(%arg0: i32, %arg1: i32, %arg2: memref<1xi32, #tpu.memory_space<smem>>, %arg3: memref<1xi32, #tpu.memory_space<smem>>) -> (i32, i32) {
    %c0_i32 = arith.constant 0 : i32
    %c0_i32_0 = arith.constant 0 : i32
    %c0_i32_1 = arith.constant 0 : i32
    return %c0_i32, %c0_i32_0 : i32, i32
  }
  func.func @transform_9(%arg0: i32, %arg1: i32, %arg2: memref<1xi32, #tpu.memory_space<smem>>, %arg3: memref<1xi32, #tpu.memory_space<smem>>) -> (i32, i32) {
    %c0_i32 = arith.constant 0 : i32
    %c0_i32_0 = arith.constant 0 : i32
    %c0_i32_1 = arith.constant 0 : i32
    return %c0_i32, %c0_i32_0 : i32, i32
  }
  func.func @transform_10(%arg0: i32, %arg1: i32, %arg2: memref<1xi32, #tpu.memory_space<smem>>, %arg3: memref<1xi32, #tpu.memory_space<smem>>) -> (i32, i32) {
    %c0_i32 = arith.constant 0 : i32
    %c0_i32_0 = arith.constant 0 : i32
    return %arg0, %c0_i32 : i32, i32
  }
}

</mosaic_0001>

<llo_original>
// kernel: tpu_custom_call.1
$region0: #{tpu_custom_call.1}
  #allocation0 [shape = 'u32[]', space=smem, size = 0x4, offset = 0x4, fixed_abs, tag = 'smem constant byte address 0x4 - core index']
  #allocation1 [shape = 'u32[144,128]{1,0:T(1,128)}', space=vmem, size = 0x12000, scoped, tag = 'internal scratch']
  #allocation2 [shape = 's32[1]{0}', space=sflag, size = 0x4, scoped, tag = 'scoped memory for tpu_custom_call.1']
  #allocation3 [shape = 's32[1]{0:T(128)S(6)}', space=smem, size = 0x200, scoped, tag = 'prefetched SMEM operand 0']
  #allocation4 [shape = 's32[1]{0:T(128)S(6)}', space=smem, size = 0x200, scoped, tag = 'prefetched SMEM operand 1']
  %s0 = inlined_call_operand.<no memory space> [shape: s32[1], index: 0, kind: input, shape index: {}]
  %s1 = inlined_call_operand.<no memory space> [shape: s32[1], index: 1, kind: input, shape index: {}]
  %s2 = inlined_call_operand.vmem [shape: f32[16,4], index: 2, kind: input, shape index: {}]
  %s3 = inlined_call_operand.vmem [shape: f32[16,6], index: 3, kind: input, shape index: {}]
  %s4 = inlined_call_operand.vmem [shape: s32[1,16], index: 4, kind: input, shape index: {}]
  %s5 = inlined_call_operand.vmem [shape: f32[1,16], index: 5, kind: input, shape index: {}]
  %s6 = inlined_call_operand.vmem [shape: f32[6,16], index: 6, kind: input, shape index: {}]
  %s7 = inlined_call_operand.vmem [shape: f32[1,16], index: 7, kind: input, shape index: {}]
  %s8 = inlined_call_operand.hbm [shape: f32[16,512], index: 8, kind: input, shape index: {}]
  %s9 = inlined_call_operand.vmem [shape: f32[1,512], index: 9, kind: input, shape index: {}]
  %s10 = inlined_call_operand.vmem [shape: f32[4,512], index: 10, kind: input, shape index: {}]
  %s11 = inlined_call_operand.hbm [shape: f32[512,128], index: 11, kind: input, shape index: {}]
  %s12 = inlined_call_operand.hbm [shape: f32[8,128], index: 12, kind: output, shape index: {}]
  %s13 = sld [smem:[#allocation0]]
  $region66: #{tpu_custom_call.1} parent=0
    _
  %s15 = ssub.s32 1, %s13
  %s16 = scalar_select 0, %s15, %s13
  %17 = sst [smem:[#allocation3]] %s0
  %18 = sst [smem:[#allocation4]] %s1
  $region1: #{tpu_custom_call.1} parent=0
    #allocation5 [shape = 'u8[32768]{0}', space=vmem, size = 0x8000, scoped, tag = 'input window, operand 8, single buffered']
    #allocation6 [shape = 's32[1]{0}', space=sflag, size = 0x4, scoped, tag = 'scoped memory for tpu_custom_call.1']
    #allocation7 [shape = 's32[1]{0}', space=sflag, size = 0x4, scoped, tag = 'scoped memory for tpu_custom_call.1']
    #allocation8 [shape = 'u8[262144]{0}', space=vmem, size = 0x40000, scoped, tag = 'input window, operand 11, single buffered']
    #allocation9 [shape = 's32[1]{0}', space=sflag, size = 0x4, scoped, tag = 'scoped memory for tpu_custom_call.1']
    #allocation10 [shape = 'u8[4096]{0}', space=vmem, size = 0x1000, scoped, tag = 'output window, operand 0, single buffered']
    %19 = vsyncpa [#allocation6], 0
    %20 = vsyncpa [#allocation9], 0
    %21 = vsyncpa [#allocation7], 0
    // Predicated region
    $region2: #{tpu_custom_call.1} parent=1 // pred_check
      _
    $region3: #{tpu_custom_call.1} parent=1 // pred_check_branch
      %23 = sbr.rel (0) target = $region5
    $region4: #{tpu_custom_call.1} parent=1 // pred_region
      %s24 = sld [smem:[#allocation3]]
      %s25 = sadd.s32 %s24, 0
      %p26 = scmp.lt.s32.totalorder %s25, 0
      %s27 = scalar_select %p26, %s25, 0
      %s28 = smul.u32 2, %s27
      %p29 = scmp.lt.s32.totalorder %s28, 1
      %s30 = scalar_select %p29, %s28, 1
      %s31 = smul.addr %s30, 8
      %s32 = scalar_lea.vmem %s2, %s31
      %s33 = sld [smem:[#allocation3]]
      %s34 = sadd.s32 %s33, 0
      %p35 = scmp.lt.s32.totalorder %s34, 0
      %s36 = scalar_select %p35, %s34, 0
      %s37 = smul.u32 2, %s36
    $region5: #{tpu_custom_call.1} parent=1 // pred_fallthru
      _
    // Predicated region
    $region6: #{tpu_custom_call.1} parent=1 // pred_check
      _
    $region7: #{tpu_custom_call.1} parent=1 // pred_check_branch
      %39 = sbr.rel (0) target = $region9
    $region8: #{tpu_custom_call.1} parent=1 // pred_region
      %s40 = sld [smem:[#allocation3]]
      %s41 = sadd.s32 %s40, 0
      %p42 = scmp.lt.s32.totalorder %s41, 0
      %s43 = scalar_select %p42, %s41, 0
      %s44 = smul.u32 2, %s43
      %p45 = scmp.lt.s32.totalorder %s44, 1
      %s46 = scalar_select %p45, %s44, 1
      %s47 = smul.addr %s46, 8
      %s48 = scalar_lea.vmem %s3, %s47
      %s49 = sld [smem:[#allocation3]]
      %s50 = sadd.s32 %s49, 0
      %p51 = scmp.lt.s32.totalorder %s50, 0
      %s52 = scalar_select %p51, %s50, 0
      %s53 = smul.u32 2, %s52
    $region9: #{tpu_custom_call.1} parent=1 // pred_fallthru
      _
    // Predicated region
    $region10: #{tpu_custom_call.1} parent=1 // pred_check
      _
    $region11: #{tpu_custom_call.1} parent=1 // pred_check_branch
      %55 = sbr.rel (0) target = $region13
    $region12: #{tpu_custom_call.1} parent=1 // pred_region
      %s56 = sld [smem:[#allocation3]]
      %s57 = sadd.s32 %s56, 0
      %p58 = scmp.lt.s32.totalorder %s57, 0
      %s59 = scalar_select %p58, %s57, 0
      %p60 = scmp.lt.s32.totalorder %s59, 0
      %s61 = scalar_select %p60, %s59, 0
      %s62 = scalar_lea.vmem %s4, %s61
      %s63 = sld [smem:[#allocation3]]
      %s64 = sadd.s32 %s63, 0
      %p65 = scmp.lt.s32.totalorder %s64, 0
      %s66 = scalar_select %p65, %s64, 0
    $region13: #{tpu_custom_call.1} parent=1 // pred_fallthru
      _
    // Predicated region
    $region14: #{tpu_custom_call.1} parent=1 // pred_check
      _
    $region15: #{tpu_custom_call.1} parent=1 // pred_check_branch
      %68 = sbr.rel (0) target = $region17
    $region16: #{tpu_custom_call.1} parent=1 // pred_region
      %s69 = sld [smem:[#allocation3]]
      %s70 = sadd.s32 %s69, 0
      %p71 = scmp.lt.s32.totalorder %s70, 0
      %s72 = scalar_select %p71, %s70, 0
      %p73 = scmp.lt.s32.totalorder %s72, 0
      %s74 = scalar_select %p73, %s72, 0
      %s75 = scalar_lea.vmem %s5, %s74
      %s76 = sld [smem:[#allocation3]]
      %s77 = sadd.s32 %s76, 0
      %p78 = scmp.lt.s32.totalorder %s77, 0
      %s79 = scalar_select %p78, %s77, 0
    $region17: #{tpu_custom_call.1} parent=1 // pred_fallthru
      _
    // Predicated region
    $region18: #{tpu_custom_call.1} parent=1 // pred_check
      _
    $region19: #{tpu_custom_call.1} parent=1 // pred_check_branch
      %81 = sbr.rel (0) target = $region21
    $region20: #{tpu_custom_call.1} parent=1 // pred_region
      _
    $region21: #{tpu_custom_call.1} parent=1 // pred_fallthru
      _
    // Predicated region
    $region22: #{tpu_custom_call.1} parent=1 // pred_check
      _
    $region23: #{tpu_custom_call.1} parent=1 // pred_check_branch
      %83 = sbr.rel (0) target = $region25
    $region24: #{tpu_custom_call.1} parent=1 // pred_region
      _
    $region25: #{tpu_custom_call.1} parent=1 // pred_fallthru
      _
    // Predicated region
    $region26: #{tpu_custom_call.1} parent=1 // pred_check
      _
    $region27: #{tpu_custom_call.1} parent=1 // pred_check_branch
      %85 = sbr.rel (0) target = $region29
    $region28: #{tpu_custom_call.1} parent=1 // pred_region
      %s87 = ssub.s32 1024, 1024
      %88 = vsyncadd [#allocation6], %s87
      %s89 = sshll.u32 [#allocation5], 4
      %s90 = int_to_ptr.vmem [resolvable:$true] %s89
      %95 = dma.hbm_to_vmem [thread:$0]  %s8, 1024, %s90, [#allocation6], 512, 512, 32
    $region29: #{tpu_custom_call.1} parent=1 // pred_fallthru
      _
    // Predicated region
    $region30: #{tpu_custom_call.1} parent=1 // pred_check
      _
    $region31: #{tpu_custom_call.1} parent=1 // pred_check_branch
      %97 = sbr.rel (0) target = $region33
    $region32: #{tpu_custom_call.1} parent=1 // pred_region
      _
    $region33: #{tpu_custom_call.1} parent=1 // pred_fallthru
      _
    // Predicated region
    $region34: #{tpu_custom_call.1} parent=1 // pred_check
      _
    $region35: #{tpu_custom_call.1} parent=1 // pred_check_branch
      %99 = sbr.rel (0) target = $region37
    $region36: #{tpu_custom_call.1} parent=1 // pred_region
      _
    $region37: #{tpu_custom_call.1} parent=1 // pred_fallthru
      _
    // Predicated region
    $region38: #{tpu_custom_call.1} parent=1 // pred_check
      _
    $region39: #{tpu_custom_call.1} parent=1 // pred_check_branch
      %101 = sbr.rel (0) target = $region41
    $region40: #{tpu_custom_call.1} parent=1 // pred_region
      %s103 = ssub.s32 8192, 8192
      %104 = vsyncadd [#allocation9], %s103
      %s105 = sshll.u32 [#allocation8], 4
      %s106 = int_to_ptr.vmem [resolvable:$true] %s105
      %111 = dma.hbm_to_vmem [thread:$0]  %s11, 8192, %s106, [#allocation9], 128, 128, 8
    $region41: #{tpu_custom_call.1} parent=1 // pred_fallthru
      _
    // Predicated region
    $region42: #{tpu_custom_call.1} parent=1 // pred_check
      _
    $region43: #{tpu_custom_call.1} parent=1 // pred_check_branch
      %113 = sbr.rel (0) target = $region45
    $region44: #{tpu_custom_call.1} parent=1 // pred_region
      %114 = dma.done [#allocation6], 1024
    $region45: #{tpu_custom_call.1} parent=1 // pred_fallthru
      _
    // Predicated region
    $region46: #{tpu_custom_call.1} parent=1 // pred_check
      _
    $region47: #{tpu_custom_call.1} parent=1 // pred_check_branch
      %116 = sbr.rel (0) target = $region49
    $region48: #{tpu_custom_call.1} parent=1 // pred_region
      %117 = dma.done [#allocation9], 8192
    $region49: #{tpu_custom_call.1} parent=1 // pred_fallthru
      _
    %s118 = sld [smem:[#allocation3]]
    %s119 = sadd.s32 %s118, 0
    %p120 = scmp.lt.s32.totalorder %s119, 0
    %s121 = scalar_select %p120, %s119, 0
    %s122 = smul.u32 2, %s121
    %p123 = scmp.lt.s32.totalorder %s122, 1
    %s124 = scalar_select %p123, %s122, 1
    %s125 = smul.addr %s124, 8
    %s126 = scalar_lea.vmem %s2, %s125
    %s127 = sld [smem:[#allocation3]]
    %s128 = sadd.s32 %s127, 0
    %p129 = scmp.lt.s32.totalorder %s128, 0
    %s130 = scalar_select %p129, %s128, 0
    %s131 = smul.u32 2, %s130
    %p132 = scmp.lt.s32.totalorder %s131, 1
    %s133 = scalar_select %p132, %s131, 1
    %s134 = smul.addr %s133, 8
    %s135 = scalar_lea.vmem %s3, %s134
    %s136 = sld [smem:[#allocation3]]
    %s137 = sadd.s32 %s136, 0
    %p138 = scmp.lt.s32.totalorder %s137, 0
    %s139 = scalar_select %p138, %s137, 0
    %p140 = scmp.lt.s32.totalorder %s139, 0
    %s141 = scalar_select %p140, %s139, 0
    %s142 = scalar_lea.vmem %s4, %s141
    %s143 = sld [smem:[#allocation3]]
    %s144 = sadd.s32 %s143, 0
    %p145 = scmp.lt.s32.totalorder %s144, 0
    %s146 = scalar_select %p145, %s144, 0
    %p147 = scmp.lt.s32.totalorder %s146, 0
    %s148 = scalar_select %p147, %s146, 0
    %s149 = scalar_lea.vmem %s5, %s148
    %s150 = sld [smem:[#allocation3]]
    %s151 = sadd.s32 %s150, 0
    %p152 = scmp.lt.s32.totalorder %s151, 0
    %s153 = scalar_select %p152, %s151, 0
    %s154 = smul.u32 2, %s153
    %p155 = scmp.lt.s32.totalorder %s154, 1
    %s156 = scalar_select %p155, %s154, 1
    %s157 = smul.addr %s156, 8
    %s158 = scalar_lea.vmem %s2, %s157
    %s159 = sld [smem:[#allocation3]]
    %s160 = sadd.s32 %s159, 0
    %p161 = scmp.lt.s32.totalorder %s160, 0
    %s162 = scalar_select %p161, %s160, 0
    %s163 = smul.u32 2, %s162
    %s164 = sld [smem:[#allocation3]]
    %s165 = sadd.s32 %s164, 0
    %p166 = scmp.lt.s32.totalorder %s165, 0
    %s167 = scalar_select %p166, %s165, 0
    %s168 = smul.u32 2, %s167
    %p169 = scmp.lt.s32.totalorder %s168, 1
    %s170 = scalar_select %p169, %s168, 1
    %s171 = smul.addr %s170, 8
    %s172 = scalar_lea.vmem %s3, %s171
    %s173 = sld [smem:[#allocation3]]
    %s174 = sadd.s32 %s173, 0
    %p175 = scmp.lt.s32.totalorder %s174, 0
    %s176 = scalar_select %p175, %s174, 0
    %s177 = smul.u32 2, %s176
    %s178 = sld [smem:[#allocation3]]
    %s179 = sadd.s32 %s178, 0
    %p180 = scmp.lt.s32.totalorder %s179, 0
    %s181 = scalar_select %p180, %s179, 0
    %p182 = scmp.lt.s32.totalorder %s181, 0
    %s183 = scalar_select %p182, %s181, 0
    %s184 = scalar_lea.vmem %s4, %s183
    %s185 = sld [smem:[#allocation3]]
    %s186 = sadd.s32 %s185, 0
    %p187 = scmp.lt.s32.totalorder %s186, 0
    %s188 = scalar_select %p187, %s186, 0
    %s189 = sld [smem:[#allocation3]]
    %s190 = sadd.s32 %s189, 0
    %p191 = scmp.lt.s32.totalorder %s190, 0
    %s192 = scalar_select %p191, %s190, 0
    %p193 = scmp.lt.s32.totalorder %s192, 0
    %s194 = scalar_select %p193, %s192, 0
    %s195 = scalar_lea.vmem %s5, %s194
    %s196 = sld [smem:[#allocation3]]
    %s197 = sadd.s32 %s196, 0
    %p198 = scmp.lt.s32.totalorder %s197, 0
    %s199 = scalar_select %p198, %s197, 0
    %p200 = scmp.eq.s32.totalorder 0, 0
    // Predicated region
    $region50: #{tpu_custom_call.1} parent=1 // pred_check
      %p201 = pneg %p200
    $region51: #{tpu_custom_call.1} parent=1 // pred_check_branch
      %203 = sbr.rel (%p201) target = $region53
    $region52: #{tpu_custom_call.1} parent=1 // pred_region
      %204 = vst [vmem:[#allocation10] sm:$0xff] 0.0
    $region53: #{tpu_custom_call.1} parent=1 // pred_fallthru
      _
    %s205 = sld [smem:[#allocation4]]
    %p206 = scmp.lt.s32.totalorder 0, %s205
    // Predicated region
    $region54: #{tpu_custom_call.1} parent=1 // pred_check
      %p207 = pneg %p206
    $region55: #{tpu_custom_call.1} parent=1 // pred_check_branch
      %209 = sbr.rel (%p207) target = $region57
    $region56: #{tpu_custom_call.1} parent=1 // pred_region
      %v210 = vld [vmem:[%s172] sm:$0xff]
      %v211 = vld [vmem:[%s172 + $0x8] sm:$0xff]
      %v212 = vld [vmem:[%s6] sm:$0x3f]
      %v213 = vld [vmem:[%s7] sm:$0x1]
      %v215 = vlaneseq
      %v216 = vshrl.u32 %v215, 7
      %v217 = vsub.s32 0, %v216
      %v218 = vrot.slane %v213, %v217
      %vm220 = vcmask 48128
      %v222 = vsel %vm220, %v210, 0
      %v225 = vsel %vm220, %v211, 0
      %vm227 = vcmask 1045504
      %v229 = vsel %vm227, %v212, 0
      %231 = vmatprep.subr.mxu0 0.0
      %232 = vmatpush1.msra.mxu0 0.0
      %233 = vmatprep.subr.mxu0 0.0
      %234 = vmatpush1.msra.mxu0 0.0
      %235 = vmatprep.subr.mxu0 0.0
      %236 = vmatpush1.msra.mxu0 0.0
      %237 = vmatprep.subr.mxu0 0.0
      %238 = vmatpush1.msra.mxu0 0.0
      %239 = vmatprep.subr.mxu0 0.0
      %240 = vmatpush1.msra.mxu0 0.0
      %241 = vmatprep.subr.mxu0 0.0
      %242 = vmatpush1.msra.mxu0 0.0
      %243 = vmatprep.subr.mxu0 0.0
      %244 = vmatpush1.msra.mxu0 0.0
      %245 = vmatprep.subr.mxu0 0.0
      %246 = vmatpush1.msra.mxu0 0.0
      %247 = vmatprep.subr.mxu0 0.0
      %248 = vmatpush1.msra.mxu0 0.0
      %249 = vmatprep.subr.mxu0 0.0
      %250 = vmatpush1.msra.mxu0 0.0
      %251 = vmatprep.subr.mxu0 0.0
      %252 = vmatpush1.msra.mxu0 0.0
      %253 = vmatprep.subr.mxu0 0.0
      %254 = vmatpush1.msra.mxu0 0.0
      %255 = vmatprep.subr.mxu0 0.0
      %256 = vmatpush1.msra.mxu0 0.0
      %257 = vmatprep.subr.mxu0 0.0
      %258 = vmatpush1.msra.mxu0 0.0
      %259 = vmatprep.subr.mxu0 0.0
      %260 = vmatpush1.msra.mxu0 0.0
      %261 = vmatprep.subr.mxu0 0.0
      %262 = vmatpush1.msra.mxu0 %v229
      %263 = vmatprep.subr.mxu0 0.0
      %264 = vmatpush2.msra.mxu0 0.0
      %265 = vmatprep.subr.mxu0 0.0
      %266 = vmatpush2.msra.mxu0 0.0
      %267 = vmatprep.subr.mxu0 0.0
      %268 = vmatpush2.msra.mxu0 0.0
      %269 = vmatprep.subr.mxu0 0.0
      %270 = vmatpush2.msra.mxu0 0.0
      %271 = vmatprep.subr.mxu0 0.0
      %272 = vmatpush2.msra.mxu0 0.0
      %273 = vmatprep.subr.mxu0 0.0
      %274 = vmatpush2.msra.mxu0 0.0
      %275 = vmatprep.subr.mxu0 0.0
      %276 = vmatpush2.msra.mxu0 0.0
      %277 = vmatprep.subr.mxu0 0.0
      %278 = vmatpush2.msra.mxu0 0.0
      %279 = vmatprep.subr.mxu0 0.0
      %280 = vmatpush2.msra.mxu0 0.0
      %281 = vmatprep.subr.mxu0 0.0
      %282 = vmatpush2.msra.mxu0 0.0
      %283 = vmatprep.subr.mxu0 0.0
      %284 = vmatpush2.msra.mxu0 0.0
      %285 = vmatprep.subr.mxu0 0.0
      %286 = vmatpush2.msra.mxu0 0.0
      %287 = vmatprep.subr.mxu0 0.0
      %288 = vmatpush2.msra.mxu0 0.0
      %289 = vmatprep.subr.mxu0 0.0
      %290 = vmatpush2.msra.mxu0 0.0
      %291 = vmatprep.subr.mxu0 0.0
      %292 = vmatpush2.msra.mxu0 0.0
      %293 = vmatprep.subr.mxu0 0.0
      %294 = vmatpush2.msra.mxu0 0.0
      %295 = vmatprep.mubr.f32.mxu0 0.0
      %296 = vmatmul.mubr.f32.gmra.mxu0 %v222
      %v297 = vpop.f32.mrf.mxu0
      %v298 = vadd.f32 %v218, %v297
      %v299 = vpop.f32.mrf.mxu0
      %300 = vmatprep.mubr.f32.mxu0 0.0
      %301 = vmatmul.mubr.f32.gmra.mxu0 %v225
      %v302 = vpop.f32.mrf.mxu0
      %v303 = vadd.f32 %v218, %v302
      %v304 = vpop.f32.mrf.mxu0
      %305 = vdwg.mxu0
      %v306 = vmax.f32 %v298, 0.0
      %v307 = vmax.f32 %v303, 0.0
      %v308 = vld [vmem:[#allocation5] sm:$0xff]
      %v309 = vld [vmem:[#allocation5 + $0x8] sm:$0xff]
      %v310 = vld [vmem:[#allocation5 + $0x10] sm:$0xff]
      %v311 = vld [vmem:[#allocation5 + $0x18] sm:$0xff]
      %v312 = vld [vmem:[#allocation5 + $0x20] sm:$0xff]
      %v313 = vld [vmem:[#allocation5 + $0x28] sm:$0xff]
      %v314 = vld [vmem:[#allocation5 + $0x30] sm:$0xff]
      %v315 = vld [vmem:[#allocation5 + $0x38] sm:$0xff]
      %v316 = vld [vmem:[%s9] sm:$0xf]
      %v318 = vlaneseq
      %v319 = vshrl.u32 %v318, 7
      %v320 = vsub.s32 0, %v319
      %v321 = vrot.slane %v316, %v320
      %v322 = vlaneseq
      %v323 = vshrl.u32 %v322, 7
      %v324 = vsub.s32 1, %v323
      %v325 = vrot.slane %v316, %v324
      %v326 = vlaneseq
      %v327 = vshrl.u32 %v326, 7
      %v328 = vsub.s32 2, %v327
      %v329 = vrot.slane %v316, %v328
      %v330 = vlaneseq
      %v331 = vshrl.u32 %v330, 7
      %v332 = vsub.s32 3, %v331
      %v333 = vrot.slane %v316, %v332
      %vm338 = vcmask 130048
      %v340 = vsel %vm338, %v306, 0
      %v343 = vsel %vm338, %v307, 0
      %345 = vmatprep.subr.mxu0 0.0
      %346 = vmatpush1.msra.mxu0 0.0
      %347 = vmatprep.subr.mxu0 0.0
      %348 = vmatpush1.msra.mxu0 0.0
      %349 = vmatprep.subr.mxu0 0.0
      %350 = vmatpush1.msra.mxu0 0.0
      %351 = vmatprep.subr.mxu0 0.0
      %352 = vmatpush1.msra.mxu0 0.0
      %353 = vmatprep.subr.mxu0 0.0
      %354 = vmatpush1.msra.mxu0 0.0
      %355 = vmatprep.subr.mxu0 0.0
      %356 = vmatpush1.msra.mxu0 0.0
      %357 = vmatprep.subr.mxu0 0.0
      %358 = vmatpush1.msra.mxu0 0.0
      %359 = vmatprep.subr.mxu0 0.0
      %360 = vmatpush1.msra.mxu0 0.0
      %361 = vmatprep.subr.mxu0 0.0
      %362 = vmatpush1.msra.mxu0 0.0
      %363 = vmatprep.subr.mxu0 0.0
      %364 = vmatpush1.msra.mxu0 0.0
      %365 = vmatprep.subr.mxu0 0.0
      %366 = vmatpush1.msra.mxu0 0.0
      %367 = vmatprep.subr.mxu0 0.0
      %368 = vmatpush1.msra.mxu0 0.0
      %369 = vmatprep.subr.mxu0 0.0
      %370 = vmatpush1.msra.mxu0 0.0
      %371 = vmatprep.subr.mxu0 0.0
      %372 = vmatpush1.msra.mxu0 0.0
      %373 = vmatprep.subr.mxu0 %v313
      %374 = vmatpush1.msra.mxu0 %v312
      %375 = vmatprep.subr.mxu0 %v309
      %376 = vmatpush1.msra.mxu0 %v308
      %377 = vmatprep.subr.mxu0 0.0
      %378 = vmatpush2.msra.mxu0 0.0
      %379 = vmatprep.subr.mxu0 0.0
      %380 = vmatpush2.msra.mxu0 0.0
      %381 = vmatprep.subr.mxu0 0.0
      %382 = vmatpush2.msra.mxu0 0.0
      %383 = vmatprep.subr.mxu0 0.0
      %384 = vmatpush2.msra.mxu0 0.0
      %385 = vmatprep.subr.mxu0 0.0
      %386 = vmatpush2.msra.mxu0 0.0
      %387 = vmatprep.subr.mxu0 0.0
      %388 = vmatpush2.msra.mxu0 0.0
      %389 = vmatprep.subr.mxu0 0.0
      %390 = vmatpush2.msra.mxu0 0.0
      %391 = vmatprep.subr.mxu0 0.0
      %392 = vmatpush2.msra.mxu0 0.0
      %393 = vmatprep.subr.mxu0 0.0
      %394 = vmatpush2.msra.mxu0 0.0
      %395 = vmatprep.subr.mxu0 0.0
      %396 = vmatpush2.msra.mxu0 0.0
      %397 = vmatprep.subr.mxu0 0.0
      %398 = vmatpush2.msra.mxu0 0.0
      %399 = vmatprep.subr.mxu0 0.0
      %400 = vmatpush2.msra.mxu0 0.0
      %401 = vmatprep.subr.mxu0 0.0
      %402 = vmatpush2.msra.mxu0 0.0
      %403 = vmatprep.subr.mxu0 0.0
      %404 = vmatpush2.msra.mxu0 0.0
      %405 = vmatprep.subr.mxu0 0.0
      %406 = vmatpush2.msra.mxu0 0.0
      %407 = vmatprep.subr.mxu0 0.0
      %408 = vmatpush2.msra.mxu0 0.0
      %409 = vmatprep.mubr.f32.mxu0 0.0
      %410 = vmatmul.mubr.f32.gmra.mxu0 %v340
      %v411 = vpop.f32.mrf.mxu0
      %v412 = vadd.f32 %v321, %v411
      %v413 = vpop.f32.mrf.mxu0
      %v414 = vadd.f32 %v325, %v413
      %415 = vmatprep.mubr.f32.mxu0 0.0
      %416 = vmatmul.mubr.f32.gmra.mxu0 %v343
      %v417 = vpop.f32.mrf.mxu0
      %v418 = vadd.f32 %v321, %v417
      %v419 = vpop.f32.mrf.mxu0
      %v420 = vadd.f32 %v325, %v419
      %421 = vdwg.mxu0
      %422 = vmatprep.subr.mxu0 0.0
      %423 = vmatpush1.msra.mxu0 0.0
      %424 = vmatprep.subr.mxu0 0.0
      %425 = vmatpush1.msra.mxu0 0.0
      %426 = vmatprep.subr.mxu0 0.0
      %427 = vmatpush1.msra.mxu0 0.0
      %428 = vmatprep.subr.mxu0 0.0
      %429 = vmatpush1.msra.mxu0 0.0
      %430 = vmatprep.subr.mxu0 0.0
      %431 = vmatpush1.msra.mxu0 0.0
      %432 = vmatprep.subr.mxu0 0.0
      %433 = vmatpush1.msra.mxu0 0.0
      %434 = vmatprep.subr.mxu0 0.0
      %435 = vmatpush1.msra.mxu0 0.0
      %436 = vmatprep.subr.mxu0 0.0
      %437 = vmatpush1.msra.mxu0 0.0
      %438 = vmatprep.subr.mxu0 0.0
      %439 = vmatpush1.msra.mxu0 0.0
      %440 = vmatprep.subr.mxu0 0.0
      %441 = vmatpush1.msra.mxu0 0.0
      %442 = vmatprep.subr.mxu0 0.0
      %443 = vmatpush1.msra.mxu0 0.0
      %444 = vmatprep.subr.mxu0 0.0
      %445 = vmatpush1.msra.mxu0 0.0
      %446 = vmatprep.subr.mxu0 0.0
      %447 = vmatpush1.msra.mxu0 0.0
      %448 = vmatprep.subr.mxu0 0.0
      %449 = vmatpush1.msra.mxu0 0.0
      %450 = vmatprep.subr.mxu0 %v315
      %451 = vmatpush1.msra.mxu0 %v314
      %452 = vmatprep.subr.mxu0 %v311
      %453 = vmatpush1.msra.mxu0 %v310
      %454 = vmatprep.subr.mxu0 0.0
      %455 = vmatpush2.msra.mxu0 0.0
      %456 = vmatprep.subr.mxu0 0.0
      %457 = vmatpush2.msra.mxu0 0.0
      %458 = vmatprep.subr.mxu0 0.0
      %459 = vmatpush2.msra.mxu0 0.0
      %460 = vmatprep.subr.mxu0 0.0
      %461 = vmatpush2.msra.mxu0 0.0
      %462 = vmatprep.subr.mxu0 0.0
      %463 = vmatpush2.msra.mxu0 0.0
      %464 = vmatprep.subr.mxu0 0.0
      %465 = vmatpush2.msra.mxu0 0.0
      %466 = vmatprep.subr.mxu0 0.0
      %467 = vmatpush2.msra.mxu0 0.0
      %468 = vmatprep.subr.mxu0 0.0
      %469 = vmatpush2.msra.mxu0 0.0
      %470 = vmatprep.subr.mxu0 0.0
      %471 = vmatpush2.msra.mxu0 0.0
      %472 = vmatprep.subr.mxu0 0.0
      %473 = vmatpush2.msra.mxu0 0.0
      %474 = vmatprep.subr.mxu0 0.0
      %475 = vmatpush2.msra.mxu0 0.0
      %476 = vmatprep.subr.mxu0 0.0
      %477 = vmatpush2.msra.mxu0 0.0
      %478 = vmatprep.subr.mxu0 0.0
      %479 = vmatpush2.msra.mxu0 0.0
      %480 = vmatprep.subr.mxu0 0.0
      %481 = vmatpush2.msra.mxu0 0.0
      %482 = vmatprep.subr.mxu0 0.0
      %483 = vmatpush2.msra.mxu0 0.0
      %484 = vmatprep.subr.mxu0 0.0
      %485 = vmatpush2.msra.mxu0 0.0
      %486 = vmatprep.mubr.f32.mxu0 0.0
      %487 = vmatmul.mubr.f32.gmra.mxu0 %v340
      %v488 = vpop.f32.mrf.mxu0
      %v489 = vadd.f32 %v329, %v488
      %v490 = vpop.f32.mrf.mxu0
      %v491 = vadd.f32 %v333, %v490
      %492 = vmatprep.mubr.f32.mxu0 0.0
      %493 = vmatmul.mubr.f32.gmra.mxu0 %v343
      %v494 = vpop.f32.mrf.mxu0
      %v495 = vadd.f32 %v329, %v494
      %v496 = vpop.f32.mrf.mxu0
      %v497 = vadd.f32 %v333, %v496
      %498 = vdwg.mxu0
      %v499 = vld [vmem:[%s158] sm:$0xff]
      %v500 = vld [vmem:[%s158 + $0x8] sm:$0xff]
      %v501 = vld [vmem:[%s10] sm:$0xff]
      %v502 = vld [vmem:[%s10 + $0x8] sm:$0xff]
      %v505 = vcombine.high %v501, %v501
      %v506 = vcombine.high %v502, %v502
      %vm507 = vcmask 31744
      %v509 = vsel %vm507, %v499, 0
      %v512 = vsel %vm507, %v500, 0
      %vm514 = vcmask 1043456
      %v515 = vsel %vm514, %v501, 0
      %v517 = vsel %vm514, %v505, 0
      %v519 = vsel %vm514, %v502, 0
      %v521 = vsel %vm514, %v506, 0
      %523 = vmatprep.subr.mxu0 0.0
      %524 = vmatpush1.msra.mxu0 0.0
      %525 = vmatprep.subr.mxu0 0.0
      %526 = vmatpush1.msra.mxu0 0.0
      %527 = vmatprep.subr.mxu0 0.0
      %528 = vmatpush1.msra.mxu0 0.0
      %529 = vmatprep.subr.mxu0 0.0
      %530 = vmatpush1.msra.mxu0 0.0
      %531 = vmatprep.subr.mxu0 0.0
      %532 = vmatpush1.msra.mxu0 0.0
      %533 = vmatprep.subr.mxu0 0.0
      %534 = vmatpush1.msra.mxu0 0.0
      %535 = vmatprep.subr.mxu0 0.0
      %536 = vmatpush1.msra.mxu0 0.0
      %537 = vmatprep.subr.mxu0 0.0
      %538 = vmatpush1.msra.mxu0 0.0
      %539 = vmatprep.subr.mxu0 0.0
      %540 = vmatpush1.msra.mxu0 0.0
      %541 = vmatprep.subr.mxu0 0.0
      %542 = vmatpush1.msra.mxu0 0.0
      %543 = vmatprep.subr.mxu0 0.0
      %544 = vmatpush1.msra.mxu0 0.0
      %545 = vmatprep.subr.mxu0 0.0
      %546 = vmatpush1.msra.mxu0 0.0
      %547 = vmatprep.subr.mxu0 0.0
      %548 = vmatpush1.msra.mxu0 0.0
      %549 = vmatprep.subr.mxu0 0.0
      %550 = vmatpush1.msra.mxu0 0.0
      %551 = vmatprep.subr.mxu0 0.0
      %552 = vmatpush1.msra.mxu0 0.0
      %553 = vmatprep.subr.mxu0 %v517
      %554 = vmatpush1.msra.mxu0 %v515
      %555 = vmatprep.subr.mxu0 0.0
      %556 = vmatpush2.msra.mxu0 0.0
      %557 = vmatprep.subr.mxu0 0.0
      %558 = vmatpush2.msra.mxu0 0.0
      %559 = vmatprep.subr.mxu0 0.0
      %560 = vmatpush2.msra.mxu0 0.0
      %561 = vmatprep.subr.mxu0 0.0
      %562 = vmatpush2.msra.mxu0 0.0
      %563 = vmatprep.subr.mxu0 0.0
      %564 = vmatpush2.msra.mxu0 0.0
      %565 = vmatprep.subr.mxu0 0.0
      %566 = vmatpush2.msra.mxu0 0.0
      %567 = vmatprep.subr.mxu0 0.0
      %568 = vmatpush2.msra.mxu0 0.0
      %569 = vmatprep.subr.mxu0 0.0
      %570 = vmatpush2.msra.mxu0 0.0
      %571 = vmatprep.subr.mxu0 0.0
      %572 = vmatpush2.msra.mxu0 0.0
      %573 = vmatprep.subr.mxu0 0.0
      %574 = vmatpush2.msra.mxu0 0.0
      %575 = vmatprep.subr.mxu0 0.0
      %576 = vmatpush2.msra.mxu0 0.0
      %577 = vmatprep.subr.mxu0 0.0
      %578 = vmatpush2.msra.mxu0 0.0
      %579 = vmatprep.subr.mxu0 0.0
      %580 = vmatpush2.msra.mxu0 0.0
      %581 = vmatprep.subr.mxu0 0.0
      %582 = vmatpush2.msra.mxu0 0.0
      %583 = vmatprep.subr.mxu0 0.0
      %584 = vmatpush2.msra.mxu0 0.0
      %585 = vmatprep.subr.mxu0 0.0
      %586 = vmatpush2.msra.mxu0 0.0
      %587 = vmatprep.mubr.f32.mxu0 0.0
      %588 = vmatmul.mubr.f32.gmra.mxu0 %v509
      %v589 = vpop.f32.mrf.mxu0
      %v590 = vadd.f32 0.0, %v589
      %v591 = vpop.f32.mrf.mxu0
      %v592 = vadd.f32 0.0, %v591
      %593 = vmatprep.mubr.f32.mxu0 0.0
      %594 = vmatmul.mubr.f32.gmra.mxu0 %v512
      %v595 = vpop.f32.mrf.mxu0
      %v596 = vadd.f32 0.0, %v595
      %v597 = vpop.f32.mrf.mxu0
      %v598 = vadd.f32 0.0, %v597
      %599 = vdwg.mxu0
      %600 = vmatprep.subr.mxu0 0.0
      %601 = vmatpush1.msra.mxu0 0.0
      %602 = vmatprep.subr.mxu0 0.0
      %603 = vmatpush1.msra.mxu0 0.0
      %604 = vmatprep.subr.mxu0 0.0
      %605 = vmatpush1.msra.mxu0 0.0
      %606 = vmatprep.subr.mxu0 0.0
      %607 = vmatpush1.msra.mxu0 0.0
      %608 = vmatprep.subr.mxu0 0.0
      %609 = vmatpush1.msra.mxu0 0.0
      %610 = vmatprep.subr.mxu0 0.0
      %611 = vmatpush1.msra.mxu0 0.0
      %612 = vmatprep.subr.mxu0 0.0
      %613 = vmatpush1.msra.mxu0 0.0
      %614 = vmatprep.subr.mxu0 0.0
      %615 = vmatpush1.msra.mxu0 0.0
      %616 = vmatprep.subr.mxu0 0.0
      %617 = vmatpush1.msra.mxu0 0.0
      %618 = vmatprep.subr.mxu0 0.0
      %619 = vmatpush1.msra.mxu0 0.0
      %620 = vmatprep.subr.mxu0 0.0
      %621 = vmatpush1.msra.mxu0 0.0
      %622 = vmatprep.subr.mxu0 0.0
      %623 = vmatpush1.msra.mxu0 0.0
      %624 = vmatprep.subr.mxu0 0.0
      %625 = vmatpush1.msra.mxu0 0.0
      %626 = vmatprep.subr.mxu0 0.0
      %627 = vmatpush1.msra.mxu0 0.0
      %628 = vmatprep.subr.mxu0 0.0
      %629 = vmatpush1.msra.mxu0 0.0
      %630 = vmatprep.subr.mxu0 %v521
      %631 = vmatpush1.msra.mxu0 %v519
      %632 = vmatprep.subr.mxu0 0.0
      %633 = vmatpush2.msra.mxu0 0.0
      %634 = vmatprep.subr.mxu0 0.0
      %635 = vmatpush2.msra.mxu0 0.0
      %636 = vmatprep.subr.mxu0 0.0
      %637 = vmatpush2.msra.mxu0 0.0
      %638 = vmatprep.subr.mxu0 0.0
      %639 = vmatpush2.msra.mxu0 0.0
      %640 = vmatprep.subr.mxu0 0.0
      %641 = vmatpush2.msra.mxu0 0.0
      %642 = vmatprep.subr.mxu0 0.0
      %643 = vmatpush2.msra.mxu0 0.0
      %644 = vmatprep.subr.mxu0 0.0
      %645 = vmatpush2.msra.mxu0 0.0
      %646 = vmatprep.subr.mxu0 0.0
      %647 = vmatpush2.msra.mxu0 0.0
      %648 = vmatprep.subr.mxu0 0.0
      %649 = vmatpush2.msra.mxu0 0.0
      %650 = vmatprep.subr.mxu0 0.0
      %651 = vmatpush2.msra.mxu0 0.0
      %652 = vmatprep.subr.mxu0 0.0
      %653 = vmatpush2.msra.mxu0 0.0
      %654 = vmatprep.subr.mxu0 0.0
      %655 = vmatpush2.msra.mxu0 0.0
      %656 = vmatprep.subr.mxu0 0.0
      %657 = vmatpush2.msra.mxu0 0.0
      %658 = vmatprep.subr.mxu0 0.0
      %659 = vmatpush2.msra.mxu0 0.0
      %660 = vmatprep.subr.mxu0 0.0
      %661 = vmatpush2.msra.mxu0 0.0
      %662 = vmatprep.subr.mxu0 0.0
      %663 = vmatpush2.msra.mxu0 0.0
      %664 = vmatprep.mubr.f32.mxu0 0.0
      %665 = vmatmul.mubr.f32.gmra.mxu0 %v509
      %v666 = vpop.f32.mrf.mxu0
      %v667 = vadd.f32 0.0, %v666
      %v668 = vpop.f32.mrf.mxu0
      %v669 = vadd.f32 0.0, %v668
      %670 = vmatprep.mubr.f32.mxu0 0.0
      %671 = vmatmul.mubr.f32.gmra.mxu0 %v512
      %v672 = vpop.f32.mrf.mxu0
      %v673 = vadd.f32 0.0, %v672
      %v674 = vpop.f32.mrf.mxu0
      %v675 = vadd.f32 0.0, %v674
      %676 = vdwg.mxu0
      %v677 = vmul.f32 %v590, %v412
      %v678 = vmul.f32 %v592, %v414
      %v679 = vmul.f32 %v667, %v489
      %v680 = vmul.f32 %v669, %v491
      %v681 = vmul.f32 %v596, %v418
      %v682 = vmul.f32 %v598, %v420
      %v683 = vmul.f32 %v673, %v495
      %v684 = vmul.f32 %v675, %v497
      %v685 = vld [vmem:[#allocation8] sm:$0xff]
      %v686 = vld [vmem:[#allocation8 + $0x8] sm:$0xff]
      %v687 = vld [vmem:[#allocation8 + $0x10] sm:$0xff]
      %v688 = vld [vmem:[#allocation8 + $0x18] sm:$0xff]
      %v689 = vld [vmem:[#allocation8 + $0x20] sm:$0xff]
      %v690 = vld [vmem:[#allocation8 + $0x28] sm:$0xff]
      %v691 = vld [vmem:[#allocation8 + $0x30] sm:$0xff]
      %v692 = vld [vmem:[#allocation8 + $0x38] sm:$0xff]
      %v693 = vld [vmem:[#allocation8 + $0x40] sm:$0xff]
      %v694 = vld [vmem:[#allocation8 + $0x48] sm:$0xff]
      %v695 = vld [vmem:[#allocation8 + $0x50] sm:$0xff]
      %v696 = vld [vmem:[#allocation8 + $0x58] sm:$0xff]
      %v697 = vld [vmem:[#allocation8 + $0x60] sm:$0xff]
      %v698 = vld [vmem:[#allocation8 + $0x68] sm:$0xff]
      %v699 = vld [vmem:[#allocation8 + $0x70] sm:$0xff]
      %v700 = vld [vmem:[#allocation8 + $0x78] sm:$0xff]
      %v701 = vld [vmem:[#allocation8 + $0x80] sm:$0xff]
      %v702 = vld [vmem:[#allocation8 + $0x88] sm:$0xff]
      %v703 = vld [vmem:[#allocation8 + $0x90] sm:$0xff]
      %v704 = vld [vmem:[#allocation8 + $0x98] sm:$0xff]
      %v705 = vld [vmem:[#allocation8 + $0xa0] sm:$0xff]
      %v706 = vld [vmem:[#allocation8 + $0xa8] sm:$0xff]
      %v707 = vld [vmem:[#allocation8 + $0xb0] sm:$0xff]
      %v708 = vld [vmem:[#allocation8 + $0xb8] sm:$0xff]
      %v709 = vld [vmem:[#allocation8 + $0xc0] sm:$0xff]
      %v710 = vld [vmem:[#allocation8 + $0xc8] sm:$0xff]
      %v711 = vld [vmem:[#allocation8 + $0xd0] sm:$0xff]
      %v712 = vld [vmem:[#allocation8 + $0xd8] sm:$0xff]
      %v713 = vld [vmem:[#allocation8 + $0xe0] sm:$0xff]
      %v714 = vld [vmem:[#allocation8 + $0xe8] sm:$0xff]
      %v715 = vld [vmem:[#allocation8 + $0xf0] sm:$0xff]
      %v716 = vld [vmem:[#allocation8 + $0xf8] sm:$0xff]
      %v717 = vld [vmem:[#allocation8 + $0x100] sm:$0xff]
      %v718 = vld [vmem:[#allocation8 + $0x108] sm:$0xff]
      %v719 = vld [vmem:[#allocation8 + $0x110] sm:$0xff]
      %v720 = vld [vmem:[#allocation8 + $0x118] sm:$0xff]
      %v721 = vld [vmem:[#allocation8 + $0x120] sm:$0xff]
      %v722 = vld [vmem:[#allocation8 + $0x128] sm:$0xff]
      %v723 = vld [vmem:[#allocation8 + $0x130] sm:$0xff]
      %v724 = vld [vmem:[#allocation8 + $0x138] sm:$0xff]
      %v725 = vld [vmem:[#allocation8 + $0x140] sm:$0xff]
      %v726 = vld [vmem:[#allocation8 + $0x148] sm:$0xff]
      %v727 = vld [vmem:[#allocation8 + $0x150] sm:$0xff]
      %v728 = vld [vmem:[#allocation8 + $0x158] sm:$0xff]
      %v729 = vld [vmem:[#allocation8 + $0x160] sm:$0xff]
      %v730 = vld [vmem:[#allocation8 + $0x168] sm:$0xff]
      %v731 = vld [vmem:[#allocation8 + $0x170] sm:$0xff]
      %v732 = vld [vmem:[#allocation8 + $0x178] sm:$0xff]
      %v733 = vld [vmem:[#allocation8 + $0x180] sm:$0xff]
      %v734 = vld [vmem:[#allocation8 + $0x188] sm:$0xff]
      %v735 = vld [vmem:[#allocation8 + $0x190] sm:$0xff]
      %v736 = vld [vmem:[#allocation8 + $0x198] sm:$0xff]
      %v737 = vld [vmem:[#allocation8 + $0x1a0] sm:$0xff]
      %v738 = vld [vmem:[#allocation8 + $0x1a8] sm:$0xff]
      %v739 = vld [vmem:[#allocation8 + $0x1b0] sm:$0xff]
      %v740 = vld [vmem:[#allocation8 + $0x1b8] sm:$0xff]
      %v741 = vld [vmem:[#allocation8 + $0x1c0] sm:$0xff]
      %v742 = vld [vmem:[#allocation8 + $0x1c8] sm:$0xff]
      %v743 = vld [vmem:[#allocation8 + $0x1d0] sm:$0xff]
      %v744 = vld [vmem:[#allocation8 + $0x1d8] sm:$0xff]
      %v745 = vld [vmem:[#allocation8 + $0x1e0] sm:$0xff]
      %v746 = vld [vmem:[#allocation8 + $0x1e8] sm:$0xff]
      %v747 = vld [vmem:[#allocation8 + $0x1f0] sm:$0xff]
      %v748 = vld [vmem:[#allocation8 + $0x1f8] sm:$0xff]
      %749 = vmatprep.subr.mxu0 0.0
      %750 = vmatpush1.msra.mxu0 %v700
      %751 = vmatprep.subr.mxu0 0.0
      %752 = vmatpush1.msra.mxu0 %v699
      %753 = vmatprep.subr.mxu0 0.0
      %754 = vmatpush1.msra.mxu0 %v698
      %755 = vmatprep.subr.mxu0 0.0
      %756 = vmatpush1.msra.mxu0 %v697
      %757 = vmatprep.subr.mxu0 0.0
      %758 = vmatpush1.msra.mxu0 %v696
      %759 = vmatprep.subr.mxu0 0.0
      %760 = vmatpush1.msra.mxu0 %v695
      %761 = vmatprep.subr.mxu0 0.0
      %762 = vmatpush1.msra.mxu0 %v694
      %763 = vmatprep.subr.mxu0 0.0
      %764 = vmatpush1.msra.mxu0 %v693
      %765 = vmatprep.subr.mxu0 0.0
      %766 = vmatpush1.msra.mxu0 %v692
      %767 = vmatprep.subr.mxu0 0.0
      %768 = vmatpush1.msra.mxu0 %v691
      %769 = vmatprep.subr.mxu0 0.0
      %770 = vmatpush1.msra.mxu0 %v690
      %771 = vmatprep.subr.mxu0 0.0
      %772 = vmatpush1.msra.mxu0 %v689
      %773 = vmatprep.subr.mxu0 0.0
      %774 = vmatpush1.msra.mxu0 %v688
      %775 = vmatprep.subr.mxu0 0.0
      %776 = vmatpush1.msra.mxu0 %v687
      %777 = vmatprep.subr.mxu0 0.0
      %778 = vmatpush1.msra.mxu0 %v686
      %779 = vmatprep.subr.mxu0 0.0
      %780 = vmatpush1.msra.mxu0 %v685
      %781 = vmatprep.subr.mxu0 0.0
      %782 = vmatpush2.msra.mxu0 %v716
      %783 = vmatprep.subr.mxu0 0.0
      %784 = vmatpush2.msra.mxu0 %v715
      %785 = vmatprep.subr.mxu0 0.0
      %786 = vmatpush2.msra.mxu0 %v714
      %787 = vmatprep.subr.mxu0 0.0
      %788 = vmatpush2.msra.mxu0 %v713
      %789 = vmatprep.subr.mxu0 0.0
      %790 = vmatpush2.msra.mxu0 %v712
      %791 = vmatprep.subr.mxu0 0.0
      %792 = vmatpush2.msra.mxu0 %v711
      %793 = vmatprep.subr.mxu0 0.0
      %794 = vmatpush2.msra.mxu0 %v710
      %795 = vmatprep.subr.mxu0 0.0
      %796 = vmatpush2.msra.mxu0 %v709
      %797 = vmatprep.subr.mxu0 0.0
      %798 = vmatpush2.msra.mxu0 %v708
      %799 = vmatprep.subr.mxu0 0.0
      %800 = vmatpush2.msra.mxu0 %v707
      %801 = vmatprep.subr.mxu0 0.0
      %802 = vmatpush2.msra.mxu0 %v706
      %803 = vmatprep.subr.mxu0 0.0
      %804 = vmatpush2.msra.mxu0 %v705
      %805 = vmatprep.subr.mxu0 0.0
      %806 = vmatpush2.msra.mxu0 %v704
      %807 = vmatprep.subr.mxu0 0.0
      %808 = vmatpush2.msra.mxu0 %v703
      %809 = vmatprep.subr.mxu0 0.0
      %810 = vmatpush2.msra.mxu0 %v702
      %811 = vmatprep.subr.mxu0 0.0
      %812 = vmatpush2.msra.mxu0 %v701
      %813 = vmatprep.mubr.f32.mxu0 %v678
      %814 = vmatmul.mubr.f32.gmra.mxu0 %v677
      %v815 = vpop.f32.mrf.mxu0
      %v816 = vadd.f32 0.0, %v815
      %v817 = vpop.f32.mrf.mxu0
      %818 = vmatprep.mubr.f32.mxu0 %v682
      %819 = vmatmul.mubr.f32.gmra.mxu0 %v681
      %v820 = vpop.f32.mrf.mxu0
      %v821 = vadd.f32 0.0, %v820
      %v822 = vpop.f32.mrf.mxu0
      %823 = vdwg.mxu0
      %824 = vmatprep.subr.mxu0 0.0
      %825 = vmatpush1.msra.mxu0 %v732
      %826 = vmatprep.subr.mxu0 0.0
      %827 = vmatpush1.msra.mxu0 %v731
      %828 = vmatprep.subr.mxu0 0.0
      %829 = vmatpush1.msra.mxu0 %v730
      %830 = vmatprep.subr.mxu0 0.0
      %831 = vmatpush1.msra.mxu0 %v729
      %832 = vmatprep.subr.mxu0 0.0
      %833 = vmatpush1.msra.mxu0 %v728
      %834 = vmatprep.subr.mxu0 0.0
      %835 = vmatpush1.msra.mxu0 %v727
      %836 = vmatprep.subr.mxu0 0.0
      %837 = vmatpush1.msra.mxu0 %v726
      %838 = vmatprep.subr.mxu0 0.0
      %839 = vmatpush1.msra.mxu0 %v725
      %840 = vmatprep.subr.mxu0 0.0
      %841 = vmatpush1.msra.mxu0 %v724
      %842 = vmatprep.subr.mxu0 0.0
      %843 = vmatpush1.msra.mxu0 %v723
      %844 = vmatprep.subr.mxu0 0.0
      %845 = vmatpush1.msra.mxu0 %v722
      %846 = vmatprep.subr.mxu0 0.0
      %847 = vmatpush1.msra.mxu0 %v721
      %848 = vmatprep.subr.mxu0 0.0
      %849 = vmatpush1.msra.mxu0 %v720
      %850 = vmatprep.subr.mxu0 0.0
      %851 = vmatpush1.msra.mxu0 %v719
      %852 = vmatprep.subr.mxu0 0.0
      %853 = vmatpush1.msra.mxu0 %v718
      %854 = vmatprep.subr.mxu0 0.0
      %855 = vmatpush1.msra.mxu0 %v717
      %856 = vmatprep.subr.mxu0 0.0
      %857 = vmatpush2.msra.mxu0 %v748
      %858 = vmatprep.subr.mxu0 0.0
      %859 = vmatpush2.msra.mxu0 %v747
      %860 = vmatprep.subr.mxu0 0.0
      %861 = vmatpush2.msra.mxu0 %v746
      %862 = vmatprep.subr.mxu0 0.0
      %863 = vmatpush2.msra.mxu0 %v745
      %864 = vmatprep.subr.mxu0 0.0
      %865 = vmatpush2.msra.mxu0 %v744
      %866 = vmatprep.subr.mxu0 0.0
      %867 = vmatpush2.msra.mxu0 %v743
      %868 = vmatprep.subr.mxu0 0.0
      %869 = vmatpush2.msra.mxu0 %v742
      %870 = vmatprep.subr.mxu0 0.0
      %871 = vmatpush2.msra.mxu0 %v741
      %872 = vmatprep.subr.mxu0 0.0
      %873 = vmatpush2.msra.mxu0 %v740
      %874 = vmatprep.subr.mxu0 0.0
      %875 = vmatpush2.msra.mxu0 %v739
      %876 = vmatprep.subr.mxu0 0.0
      %877 = vmatpush2.msra.mxu0 %v738
      %878 = vmatprep.subr.mxu0 0.0
      %879 = vmatpush2.msra.mxu0 %v737
      %880 = vmatprep.subr.mxu0 0.0
      %881 = vmatpush2.msra.mxu0 %v736
      %882 = vmatprep.subr.mxu0 0.0
      %883 = vmatpush2.msra.mxu0 %v735
      %884 = vmatprep.subr.mxu0 0.0
      %885 = vmatpush2.msra.mxu0 %v734
      %886 = vmatprep.subr.mxu0 0.0
      %887 = vmatpush2.msra.mxu0 %v733
      %888 = vmatprep.mubr.f32.mxu0 %v680
      %889 = vmatmul.mubr.f32.gmra.mxu0 %v679
      %v890 = vpop.f32.mrf.mxu0
      %v891 = vadd.f32 %v816, %v890
      %v892 = vpop.f32.mrf.mxu0
      %893 = vmatprep.mubr.f32.mxu0 %v684
      %894 = vmatmul.mubr.f32.gmra.mxu0 %v683
      %v895 = vpop.f32.mrf.mxu0
      %v896 = vadd.f32 %v821, %v895
      %v897 = vpop.f32.mrf.mxu0
      %898 = vdwg.mxu0
      %v899 = vlaneseq
      %v900 = vshrl.u32 %v899, 7
      %s901 = smul.u32 0, 8
      %v902 = vstv %s901
      %v903 = vadd.s32 %v900, %v902
      %v904 = vld [vmem:[%s184] sm:$0x1]
      %v905 = vlaneseq
      %v906 = vshrl.u32 %v905, 7
      %v907 = vsub.s32 0, %v906
      %v908 = vrot.slane %v904, %v907
      %vm909 = vcmp.eq.s32.totalorder %v908, %v903
      %v910 = vld [vmem:[%s195] sm:$0x1]
      %v912 = vlaneseq
      %v913 = vshrl.u32 %v912, 7
      %v914 = vsub.s32 0, %v913
      %v915 = vrot.slane %v910, %v914
      %v917 = vsel %vm909, %v915, 0.0
      %v918 = vld [vmem:[#allocation10] sm:$0xff]
      %v920 = vsel %vm338, %v917, 0
      %922 = vmatprep.subr.mxu0 0.0
      %923 = vmatpush1.msra.mxu0 0.0
      %924 = vmatprep.subr.mxu0 0.0
      %925 = vmatpush1.msra.mxu0 0.0
      %926 = vmatprep.subr.mxu0 0.0
      %927 = vmatpush1.msra.mxu0 0.0
      %928 = vmatprep.subr.mxu0 0.0
      %929 = vmatpush1.msra.mxu0 0.0
      %930 = vmatprep.subr.mxu0 0.0
      %931 = vmatpush1.msra.mxu0 0.0
      %932 = vmatprep.subr.mxu0 0.0
      %933 = vmatpush1.msra.mxu0 0.0
      %934 = vmatprep.subr.mxu0 0.0
      %935 = vmatpush1.msra.mxu0 0.0
      %936 = vmatprep.subr.mxu0 0.0
      %937 = vmatpush1.msra.mxu0 0.0
      %938 = vmatprep.subr.mxu0 0.0
      %939 = vmatpush1.msra.mxu0 0.0
      %940 = vmatprep.subr.mxu0 0.0
      %941 = vmatpush1.msra.mxu0 0.0
      %942 = vmatprep.subr.mxu0 0.0
      %943 = vmatpush1.msra.mxu0 0.0
      %944 = vmatprep.subr.mxu0 0.0
      %945 = vmatpush1.msra.mxu0 0.0
      %946 = vmatprep.subr.mxu0 0.0
      %947 = vmatpush1.msra.mxu0 0.0
      %948 = vmatprep.subr.mxu0 0.0
      %949 = vmatpush1.msra.mxu0 0.0
      %950 = vmatprep.subr.mxu0 0.0
      %951 = vmatpush1.msra.mxu0 %v896
      %952 = vmatprep.subr.mxu0 0.0
      %953 = vmatpush1.msra.mxu0 %v891
      %954 = vmatprep.subr.mxu0 0.0
      %955 = vmatpush2.msra.mxu0 0.0
      %956 = vmatprep.subr.mxu0 0.0
      %957 = vmatpush2.msra.mxu0 0.0
      %958 = vmatprep.subr.mxu0 0.0
      %959 = vmatpush2.msra.mxu0 0.0
      %960 = vmatprep.subr.mxu0 0.0
      %961 = vmatpush2.msra.mxu0 0.0
      %962 = vmatprep.subr.mxu0 0.0
      %963 = vmatpush2.msra.mxu0 0.0
      %964 = vmatprep.subr.mxu0 0.0
      %965 = vmatpush2.msra.mxu0 0.0
      %966 = vmatprep.subr.mxu0 0.0
      %967 = vmatpush2.msra.mxu0 0.0
      %968 = vmatprep.subr.mxu0 0.0
      %969 = vmatpush2.msra.mxu0 0.0
      %970 = vmatprep.subr.mxu0 0.0
      %971 = vmatpush2.msra.mxu0 0.0
      %972 = vmatprep.subr.mxu0 0.0
      %973 = vmatpush2.msra.mxu0 0.0
      %974 = vmatprep.subr.mxu0 0.0
      %975 = vmatpush2.msra.mxu0 0.0
      %976 = vmatprep.subr.mxu0 0.0
      %977 = vmatpush2.msra.mxu0 0.0
      %978 = vmatprep.subr.mxu0 0.0
      %979 = vmatpush2.msra.mxu0 0.0
      %980 = vmatprep.subr.mxu0 0.0
      %981 = vmatpush2.msra.mxu0 0.0
      %982 = vmatprep.subr.mxu0 0.0
      %983 = vmatpush2.msra.mxu0 0.0
      %984 = vmatprep.subr.mxu0 0.0
      %985 = vmatpush2.msra.mxu0 0.0
      %986 = vmatprep.mubr.f32.mxu0 0.0
      %987 = vmatmul.mubr.f32.gmra.mxu0 %v920
      %v988 = vpop.f32.mrf.mxu0
      %v989 = vadd.f32 0.0, %v988
      %v990 = vpop.f32.mrf.mxu0
      %991 = vdwg.mxu0
      %v992 = vadd.f32 %v918, %v989
      %993 = vst [vmem:[#allocation10] sm:$0xff] %v992
    $region57: #{tpu_custom_call.1} parent=1 // pred_fallthru
      _
    // Predicated region
    $region58: #{tpu_custom_call.1} parent=1 // pred_check
      _
    $region59: #{tpu_custom_call.1} parent=1 // pred_check_branch
      %995 = sbr.rel (0) target = $region61
    $region60: #{tpu_custom_call.1} parent=1 // pred_region
      %s997 = ssub.s32 128, 128
      %998 = vsyncadd [#allocation7], %s997
      %s1000 = sshll.u32 [#allocation10], 4
      %s1001 = int_to_ptr.vmem [resolvable:$true] %s1000
      %1003 = dma.vmem_to_hbm [thread:$0]  %s1001, 128, %s12, [#allocation7]
    $region61: #{tpu_custom_call.1} parent=1 // pred_fallthru
      _
    // Predicated region
    $region62: #{tpu_custom_call.1} parent=1 // pred_check
      _
    $region63: #{tpu_custom_call.1} parent=1 // pred_check_branch
      %1005 = sbr.rel (0) target = $region65
    $region64: #{tpu_custom_call.1} parent=1 // pred_region
      %1006 = dma.done [#allocation7], 128
    $region65: #{tpu_custom_call.1} parent=1 // pred_fallthru
      _
    %1007 = vsyncpa [#allocation6], 1
    %1008 = vsyncpa [#allocation9], 1
    %1009 = vsyncpa [#allocation7], 1

</llo_original>
